<compile_context>
chip_gen: v5e
topology: v5e:2x2
jax: 0.10.0
libtpu: 0.0.40
codegen_flags: <defaults>
</compile_context>

<pallas_src>
import functools

import jax
import jax.numpy as jnp
from jax import lax
from jax.experimental import pallas as pl
from jax.experimental.pallas import tpu as pltpu


def fcnn_kernel(x_ref, w1_ref, b1_ref, w2_ref, b2_ref, w3_ref, b3_ref, o_ref, *, chunk):
    """One batch tile of the MLP.

    x_ref : (bn, in_dim)   natural layout (streamed per grid step)
    w*_ref: PyTorch nn.Linear layout (out_features, in_features), VMEM-resident
    b1/b2 : (hidden, 1),  b3: (1, out_dim)
    o_ref : (bn, out_dim)  natural layout
    Computes y = tanh(tanh(x W1^T + b1) W2^T + b2) W3^T + b3 (the PyTorch fwd),
    with the two hidden layers evaluated in the transposed (lane-dense) frame.
    """
    bn = x_ref.shape[0]
    num_chunks = bn // chunk

    # Resident weights: read once per grid step.
    w1 = w1_ref[...]                                   # (hidden, in_dim)
    w2 = w2_ref[...]                                   # (hidden, hidden)
    w3 = w3_ref[...]                                   # (out_dim, hidden)
    hidden = w1.shape[0]
    out_dim = w3.shape[0]
    # Hoist bias broadcasts out of the chunk loop (JAX does not CSE broadcasts).
    b1 = jnp.broadcast_to(b1_ref[...], (hidden, chunk))
    b2 = jnp.broadcast_to(b2_ref[...], (hidden, chunk))
    b3 = jnp.broadcast_to(b3_ref[...], (chunk, out_dim))

    def body(c, carry):
        r = pl.multiple_of(c * chunk, chunk)
        x = x_ref[pl.ds(r, chunk), :]                  # (chunk, in_dim), natural layout
        # Layer 1: h1 = tanh(W1 @ x^T + b1) -> (hidden, chunk); contraction over
        # in_dim expressed via dot_general so no HBM-level transpose is needed.
        h = jnp.tanh(
            lax.dot_general(w1, x, (((1,), (1,)), ((), ())),
                            preferred_element_type=jnp.float32) + b1)
        # Layer 2: h2 = tanh(W2 @ h1 + b2) -> (hidden, chunk)
        h = jnp.tanh(
            jnp.dot(w2, h, preferred_element_type=jnp.float32) + b2)
        # Layer 3 emitted directly in the natural (chunk, out_dim) layout:
        # y = h2^T @ W3^T + b3
        y = lax.dot_general(h, w3, (((0,), (1,)), ((), ())),
                            preferred_element_type=jnp.float32) + b3
        o_ref[pl.ds(r, chunk), :] = y.astype(o_ref.dtype)
        return carry

    # Short, fixed trip count -> unrolled for LLO scheduler visibility.
    lax.fori_loop(0, num_chunks, body, 0, unroll=True)


def fcnn_forward(x, w1, b1, w2, b2, w3, b3, *, bn_target=2048, chunk_target=512):
    """x: (..., in_dim) f32. Weights in PyTorch layout: w (out, in), b (out,).
    Returns (..., out_dim)."""
    in_dim = w1.shape[1]
    hidden = w1.shape[0]
    out_dim = w3.shape[0]
    lead = x.shape[:-1]

    x2 = x.reshape(-1, in_dim)
    n = x2.shape[0]

    def round_up(a, m):
        return ((a + m - 1) // m) * m

    # Batch tile: large enough to amortize the ~0.35 us per-grid-step overhead,
    # but capped so moderate N still yields >= 2 tiles (both v7x TensorCores busy).
    bn = min(bn_target, max(round_up(pl.cdiv(n, 2), 8), 8))
    if bn > chunk_target:
        bn = round_up(bn, chunk_target)   # keep bn % chunk == 0
        chunk = chunk_target
    else:
        chunk = bn

    grid = (pl.cdiv(n, bn),)
    # NOTE: when n % bn != 0 the last block is partial. Pallas masks the
    # write-back of out-of-range rows; the garbage rows read in the tail tile
    # are row-local (every sample independent), so no padding copy is needed.

    kernel = functools.partial(fcnn_kernel, chunk=chunk)

    y2 = pl.pallas_call(
        kernel,
        out_shape=jax.ShapeDtypeStruct((n, out_dim), x.dtype),
        grid_spec=pltpu.PrefetchScalarGridSpec(
            num_scalar_prefetch=0,
            grid=grid,
            in_specs=[
                pl.BlockSpec((bn, in_dim), lambda i: (i, 0)),       # x tile (streamed)
                pl.BlockSpec((hidden, in_dim), lambda i: (0, 0)),   # W1 (resident)
                pl.BlockSpec((hidden, 1), lambda i: (0, 0)),        # b1
                pl.BlockSpec((hidden, hidden), lambda i: (0, 0)),   # W2
                pl.BlockSpec((hidden, 1), lambda i: (0, 0)),        # b2
                pl.BlockSpec((out_dim, hidden), lambda i: (0, 0)),  # W3
                pl.BlockSpec((1, out_dim), lambda i: (0, 0)),       # b3
            ],
            out_specs=pl.BlockSpec((bn, out_dim), lambda i: (i, 0)),
        ),
        compiler_params=pltpu.CompilerParams(
            dimension_semantics=("parallel",),  # independent tiles -> megacore on v7x
        ),
    )(
        x2,
        w1, b1.reshape(hidden, 1),
        w2, b2.reshape(hidden, 1),
        w3, b3.reshape(1, out_dim),
    )

    return y2.reshape(*lead, out_dim)


def reference_forward(x, w1, b1, w2, b2, w3, b3):
    h = jnp.tanh(x @ w1.T + b1)
    h = jnp.tanh(h @ w2.T + b2)
    return h @ w3.T + b3


if __name__ == "__main__":
    key = jax.random.PRNGKey(0)
    in_dim, hidden_dim, out_dim = 4, 32, 8
    batch, seq = 2, 16  # FCNN applies to the last dim; leading dims are batch-like

    ks = jax.random.split(key, 7)
    x = jax.random.normal(ks[0], (batch, seq, in_dim), dtype=jnp.float32)

    def lin_init(kw, kb, fan_in, fan_out):
        # Matches torch.nn.Linear default init: U(-1/sqrt(fan_in), 1/sqrt(fan_in))
        bound = 1.0 / (fan_in ** 0.5)
        w = jax.random.uniform(kw, (fan_out, fan_in), jnp.float32, -bound, bound)
        b = jax.random.uniform(kb, (fan_out,), jnp.float32, -bound, bound)
        return w, b

    w1, b1 = lin_init(ks[1], ks[2], in_dim, hidden_dim)
    w2, b2 = lin_init(ks[3], ks[4], hidden_dim, hidden_dim)
    w3, b3 = lin_init(ks[5], ks[6], hidden_dim, out_dim)

    y = fcnn_forward(x, w1, b1, w2, b2, w3, b3)
    jax.block_until_ready(y)

    y_ref = reference_forward(x, w1, b1, w2, b2, w3, b3)
    assert y.shape == (batch, seq, out_dim)
    assert jnp.allclose(y, y_ref, atol=1e-5, rtol=1e-5)

    print("KERNEL_OK")
</pallas_src>

<mosaic_0001>
module attributes {stable_mosaic.version = 11 : i64} {
  func.func @fcnn_kernel(%arg0: i32, %arg1: memref<16x4xf32, #tpu.memory_space<vmem>>, %arg2: memref<32x4xf32, #tpu.memory_space<vmem>>, %arg3: memref<32x1xf32, #tpu.memory_space<vmem>>, %arg4: memref<32x32xf32, #tpu.memory_space<vmem>>, %arg5: memref<32x1xf32, #tpu.memory_space<vmem>>, %arg6: memref<8x32xf32, #tpu.memory_space<vmem>>, %arg7: memref<1x8xf32, #tpu.memory_space<vmem>>, %arg8: memref<16x8xf32, #tpu.memory_space<vmem>>) attributes {dimension_semantics = [#tpu.dimension_semantics<parallel>], iteration_bounds = array<i64: 2>, scalar_prefetch = 0 : i64, scratch_operands = 0 : i64, tpu.core_type = #tpu.core_type<tc>, window_params = [{transform_indices = @transform_0, window_bounds = array<i64: 16, 4>}, {pipeline_mode = #tpu.pipeline_mode<synchronous>, transform_indices = @transform_1, window_bounds = array<i64: 32, 4>}, {pipeline_mode = #tpu.pipeline_mode<synchronous>, transform_indices = @transform_2, window_bounds = array<i64: 32, 1>}, {pipeline_mode = #tpu.pipeline_mode<synchronous>, transform_indices = @transform_3, window_bounds = array<i64: 32, 32>}, {pipeline_mode = #tpu.pipeline_mode<synchronous>, transform_indices = @transform_4, window_bounds = array<i64: 32, 1>}, {pipeline_mode = #tpu.pipeline_mode<synchronous>, transform_indices = @transform_5, window_bounds = array<i64: 8, 32>}, {pipeline_mode = #tpu.pipeline_mode<synchronous>, transform_indices = @transform_6, window_bounds = array<i64: 1, 8>}, {transform_indices = @transform_7, window_bounds = array<i64: 16, 8>}]} {
    %c0 = arith.constant 0 : index
    %c0_0 = arith.constant 0 : index
    %0 = vector.load %arg2[%c0, %c0_0] : memref<32x4xf32, #tpu.memory_space<vmem>>, vector<32x4xf32>
    %c0_1 = arith.constant 0 : index
    %c0_2 = arith.constant 0 : index
    %1 = vector.load %arg4[%c0_1, %c0_2] : memref<32x32xf32, #tpu.memory_space<vmem>>, vector<32x32xf32>
    %c0_3 = arith.constant 0 : index
    %c0_4 = arith.constant 0 : index
    %2 = vector.load %arg6[%c0_3, %c0_4] : memref<8x32xf32, #tpu.memory_space<vmem>>, vector<8x32xf32>
    %c0_5 = arith.constant 0 : index
    %c0_6 = arith.constant 0 : index
    %3 = vector.load %arg3[%c0_5, %c0_6] : memref<32x1xf32, #tpu.memory_space<vmem>>, vector<32x1xf32>
    %4 = vector.shape_cast %3 : vector<32x1xf32> to vector<32x1xf32>
    %5 = vector.broadcast %4 : vector<32x1xf32> to vector<32x16xf32>
    %c0_7 = arith.constant 0 : index
    %c0_8 = arith.constant 0 : index
    %6 = vector.load %arg5[%c0_7, %c0_8] : memref<32x1xf32, #tpu.memory_space<vmem>>, vector<32x1xf32>
    %7 = vector.shape_cast %6 : vector<32x1xf32> to vector<32x1xf32>
    %8 = vector.broadcast %7 : vector<32x1xf32> to vector<32x16xf32>
    %c0_9 = arith.constant 0 : index
    %c0_10 = arith.constant 0 : index
    %9 = vector.load %arg7[%c0_9, %c0_10] : memref<1x8xf32, #tpu.memory_space<vmem>>, vector<1x8xf32>
    %10 = vector.shape_cast %9 : vector<1x8xf32> to vector<1x8xf32>
    %11 = vector.broadcast %10 : vector<1x8xf32> to vector<16x8xf32>
    %c0_i32 = arith.constant 0 : i32
    %c16_i32 = arith.constant 16 : i32
    %12 = arith.muli %c0_i32, %c16_i32 : i32
    %13 = tpu.assume_multiple %12, 16 : i32
    %14 = arith.index_cast %13 : i32 to index
    %c0_11 = arith.constant 0 : index
    %15 = vector.load %arg1[%14, %c0_11] : memref<16x4xf32, #tpu.memory_space<vmem>>, vector<16x4xf32>
    %cst = arith.constant dense<0.000000e+00> : vector<32x16xf32>
    %16 = tpu.matmul %0, %15, %cst {dimension_numbers = #tpu.dot_dimension_numbers<[1], [1], [0], [0], [0, 0, 1, 0], [], []>} : vector<32x4xf32>, vector<16x4xf32>, vector<32x16xf32> -> vector<32x16xf32>
    %17 = arith.addf %16, %5 : vector<32x16xf32>
    %18 = math.tanh %17 : vector<32x16xf32>
    %cst_12 = arith.constant dense<0.000000e+00> : vector<32x16xf32>
    %19 = tpu.matmul %1, %18, %cst_12 {dimension_numbers = #tpu.dot_dimension_numbers<[1], [0], [0], [1], [0, 0, 1, 1], [], []>} : vector<32x32xf32>, vector<32x16xf32>, vector<32x16xf32> -> vector<32x16xf32>
    %20 = arith.addf %19, %8 : vector<32x16xf32>
    %21 = math.tanh %20 : vector<32x16xf32>
    %cst_13 = arith.constant dense<0.000000e+00> : vector<16x8xf32>
    %22 = tpu.matmul %21, %2, %cst_13 {dimension_numbers = #tpu.dot_dimension_numbers<[0], [1], [1], [0], [0, 1, 1, 0], [], []>} : vector<32x16xf32>, vector<8x32xf32>, vector<16x8xf32> -> vector<16x8xf32>
    %23 = arith.addf %22, %11 : vector<16x8xf32>
    %24 = arith.index_cast %13 : i32 to index
    %c0_14 = arith.constant 0 : index
    %25 = vector.load %arg8[%24, %c0_14] : memref<16x8xf32, #tpu.memory_space<vmem>>, vector<16x8xf32>
    tpu.vector_store %arg8[%24, %c0_14], %23 {strides = array<i32>} : memref<16x8xf32, #tpu.memory_space<vmem>>, vector<16x8xf32>,
    %c1_i32 = arith.constant 1 : i32
    return
  }
  func.func @transform_0(%arg0: i32) -> (i32, i32) {
    %c0_i32 = arith.constant 0 : i32
    %c0_i32_0 = arith.constant 0 : i32
    return %arg0, %c0_i32 : i32, i32
  }
  func.func @transform_1(%arg0: i32) -> (i32, i32) {
    %c0_i32 = arith.constant 0 : i32
    %c0_i32_0 = arith.constant 0 : i32
    %c0_i32_1 = arith.constant 0 : i32
    return %c0_i32, %c0_i32_0 : i32, i32
  }
  func.func @transform_2(%arg0: i32) -> (i32, i32) {
    %c0_i32 = arith.constant 0 : i32
    %c0_i32_0 = arith.constant 0 : i32
    %c0_i32_1 = arith.constant 0 : i32
    return %c0_i32, %c0_i32_0 : i32, i32
  }
  func.func @transform_3(%arg0: i32) -> (i32, i32) {
    %c0_i32 = arith.constant 0 : i32
    %c0_i32_0 = arith.constant 0 : i32
    %c0_i32_1 = arith.constant 0 : i32
    return %c0_i32, %c0_i32_0 : i32, i32
  }
  func.func @transform_4(%arg0: i32) -> (i32, i32) {
    %c0_i32 = arith.constant 0 : i32
    %c0_i32_0 = arith.constant 0 : i32
    %c0_i32_1 = arith.constant 0 : i32
    return %c0_i32, %c0_i32_0 : i32, i32
  }
  func.func @transform_5(%arg0: i32) -> (i32, i32) {
    %c0_i32 = arith.constant 0 : i32
    %c0_i32_0 = arith.constant 0 : i32
    %c0_i32_1 = arith.constant 0 : i32
    return %c0_i32, %c0_i32_0 : i32, i32
  }
  func.func @transform_6(%arg0: i32) -> (i32, i32) {
    %c0_i32 = arith.constant 0 : i32
    %c0_i32_0 = arith.constant 0 : i32
    %c0_i32_1 = arith.constant 0 : i32
    return %c0_i32, %c0_i32_0 : i32, i32
  }
  func.func @transform_7(%arg0: i32) -> (i32, i32) {
    %c0_i32 = arith.constant 0 : i32
    %c0_i32_0 = arith.constant 0 : i32
    return %arg0, %c0_i32 : i32, i32
  }
}

</mosaic_0001>

<llo_original>
// kernel: tpu_custom_call.1
$region0: #{tpu_custom_call.1}
  #allocation0 [shape = 'u32[]', space=smem, size = 0x4, offset = 0x4, fixed_abs, tag = 'smem constant byte address 0x4 - core index']
  #allocation1 [shape = 'u32[72,128]{1,0:T(1,128)}', space=vmem, size = 0x9000, scoped, tag = 'internal scratch']
  %s0 = inlined_call_operand.vmem [shape: f32[32,4], index: 0, kind: input, shape index: {}]
  %s1 = inlined_call_operand.vmem [shape: f32[32,4], index: 1, kind: input, shape index: {}]
  %s2 = inlined_call_operand.vmem [shape: f32[32,1], index: 2, kind: input, shape index: {}]
  %s3 = inlined_call_operand.vmem [shape: f32[32,32], index: 3, kind: input, shape index: {}]
  %s4 = inlined_call_operand.vmem [shape: f32[32,1], index: 4, kind: input, shape index: {}]
  %s5 = inlined_call_operand.vmem [shape: f32[8,32], index: 5, kind: input, shape index: {}]
  %s6 = inlined_call_operand.vmem [shape: f32[1,8], index: 6, kind: input, shape index: {}]
  %s7 = inlined_call_operand.vmem [shape: f32[32,8], index: 7, kind: output, shape index: {}]
  %s8 = sld [smem:[#allocation0]]
  $region61: #{tpu_custom_call.1} parent=0
    _
  %s10 = ssub.s32 1, %s8
  %s11 = scalar_select 0, %s10, %s8
  loop: start=0, step=1, limit=4
  $region2: #{tpu_custom_call.1} parent=0 // loop_pre_header
    _
  $region3: #{tpu_custom_call.1} parent=0 // loop_header
    %s13 = sphi 0, %s17
    %p14 = scmp.ge.s32.totalorder %s13, 4
    %s23 = sphi 0, %s25
    %s26 = sphi 0, %s23
    %s27 = sphi 0, %s26
    %s43 = sphi 0, %s27
    %s47 = sphi 0, %s47
    %s49 = sphi 0, %s47
    %s50 = sphi 0, %s49
    %s64 = sphi 0, %s50
    %s68 = sphi 0, %s68
    %s70 = sphi 0, %s68
    %s71 = sphi 0, %s70
    %s85 = sphi 0, %s71
    %s89 = sphi 0, %s89
    %s91 = sphi 0, %s89
    %s92 = sphi 0, %s91
    %s106 = sphi 0, %s92
    %s110 = sphi 0, %s110
    %s112 = sphi 0, %s110
    %s113 = sphi 0, %s112
    %s127 = sphi 0, %s113
    %s131 = sphi 0, %s131
    %s133 = sphi 0, %s131
    %s134 = sphi 0, %s133
    %s148 = sphi 0, %s134
    %s152 = sphi 0, %s152
    %s154 = sphi 0, %s152
    %s155 = sphi 0, %s154
    %s169 = sphi 0, %s155
    %s175 = sphi 0, %s177
    %s178 = sphi 0, %s175
    %s179 = sphi 0, %s178
    %s195 = sphi 0, %s179
  $region4: #{tpu_custom_call.1} parent=0 // loop_header_branch
    %16 = sbr.rel (%p14) target = $region8
  $region5: #{tpu_custom_call.1} parent=0 // loop_body
    %s18 = ssub.s32 %s13, 1
    %s19 = ssub.s32 %s13, 2
    %s20 = sadd.s32 %s13, 1
    %s21 = ssub.s32 %s13, %s20
    %p22 = scmp.eq.s32.totalorder %s21, 0
    %s24 = sadd.s32 %s23, 1
    %s25 = scalar_select %p22, %s23, %s24
    %p28 = pneg %p22
    %p29 = scmp.eq.s32.totalorder %s13, 1
    %p30 = por %p28, %p29
    %p31 = scmp.ne.s32.totalorder %s23, %s26
    %p32 = scmp.eq.s32.totalorder %s13, 0
    %p33 = por %p31, %p32
    %p34 = scmp.ne.s32.totalorder %s23, %s26
    %p35 = scmp.eq.s32.totalorder %s18, 1
    %p36 = por %p34, %p35
    %p37 = scmp.ne.s32.totalorder %s26, %s27
    %p38 = scmp.eq.s32.totalorder %s18, 0
    %p39 = por %p37, %p38
    %p40 = scmp.ne.s32.totalorder %s26, %s27
    %p41 = scmp.eq.s32.totalorder %s19, 1
    %p42 = por %p40, %p41
    %p44 = scmp.ne.s32.totalorder %s27, %s43
    %p45 = scmp.eq.s32.totalorder %s19, 0
    %p46 = por %p44, %p45
    %s48 = sadd.s32 %s47, 1
    %p51 = scmp.eq.s32.totalorder %s13, 1
    %p52 = scmp.ne.s32.totalorder %s47, %s49
    %p53 = scmp.eq.s32.totalorder %s13, 0
    %p54 = por %p52, %p53
    %p55 = scmp.ne.s32.totalorder %s47, %s49
    %p56 = scmp.eq.s32.totalorder %s18, 1
    %p57 = por %p55, %p56
    %p58 = scmp.ne.s32.totalorder %s49, %s50
    %p59 = scmp.eq.s32.totalorder %s18, 0
    %p60 = por %p58, %p59
    %p61 = scmp.ne.s32.totalorder %s49, %s50
    %p62 = scmp.eq.s32.totalorder %s19, 1
    %p63 = por %p61, %p62
    %p65 = scmp.ne.s32.totalorder %s50, %s64
    %p66 = scmp.eq.s32.totalorder %s19, 0
    %p67 = por %p65, %p66
    %s69 = sadd.s32 %s68, 1
    %p72 = scmp.eq.s32.totalorder %s13, 1
    %p73 = scmp.ne.s32.totalorder %s68, %s70
    %p74 = scmp.eq.s32.totalorder %s13, 0
    %p75 = por %p73, %p74
    %p76 = scmp.ne.s32.totalorder %s68, %s70
    %p77 = scmp.eq.s32.totalorder %s18, 1
    %p78 = por %p76, %p77
    %p79 = scmp.ne.s32.totalorder %s70, %s71
    %p80 = scmp.eq.s32.totalorder %s18, 0
    %p81 = por %p79, %p80
    %p82 = scmp.ne.s32.totalorder %s70, %s71
    %p83 = scmp.eq.s32.totalorder %s19, 1
    %p84 = por %p82, %p83
    %p86 = scmp.ne.s32.totalorder %s71, %s85
    %p87 = scmp.eq.s32.totalorder %s19, 0
    %p88 = por %p86, %p87
    %s90 = sadd.s32 %s89, 1
    %p93 = scmp.eq.s32.totalorder %s13, 1
    %p94 = scmp.ne.s32.totalorder %s89, %s91
    %p95 = scmp.eq.s32.totalorder %s13, 0
    %p96 = por %p94, %p95
    %p97 = scmp.ne.s32.totalorder %s89, %s91
    %p98 = scmp.eq.s32.totalorder %s18, 1
    %p99 = por %p97, %p98
    %p100 = scmp.ne.s32.totalorder %s91, %s92
    %p101 = scmp.eq.s32.totalorder %s18, 0
    %p102 = por %p100, %p101
    %p103 = scmp.ne.s32.totalorder %s91, %s92
    %p104 = scmp.eq.s32.totalorder %s19, 1
    %p105 = por %p103, %p104
    %p107 = scmp.ne.s32.totalorder %s92, %s106
    %p108 = scmp.eq.s32.totalorder %s19, 0
    %p109 = por %p107, %p108
    %s111 = sadd.s32 %s110, 1
    %p114 = scmp.eq.s32.totalorder %s13, 1
    %p115 = scmp.ne.s32.totalorder %s110, %s112
    %p116 = scmp.eq.s32.totalorder %s13, 0
    %p117 = por %p115, %p116
    %p118 = scmp.ne.s32.totalorder %s110, %s112
    %p119 = scmp.eq.s32.totalorder %s18, 1
    %p120 = por %p118, %p119
    %p121 = scmp.ne.s32.totalorder %s112, %s113
    %p122 = scmp.eq.s32.totalorder %s18, 0
    %p123 = por %p121, %p122
    %p124 = scmp.ne.s32.totalorder %s112, %s113
    %p125 = scmp.eq.s32.totalorder %s19, 1
    %p126 = por %p124, %p125
    %p128 = scmp.ne.s32.totalorder %s113, %s127
    %p129 = scmp.eq.s32.totalorder %s19, 0
    %p130 = por %p128, %p129
    %s132 = sadd.s32 %s131, 1
    %p135 = scmp.eq.s32.totalorder %s13, 1
    %p136 = scmp.ne.s32.totalorder %s131, %s133
    %p137 = scmp.eq.s32.totalorder %s13, 0
    %p138 = por %p136, %p137
    %p139 = scmp.ne.s32.totalorder %s131, %s133
    %p140 = scmp.eq.s32.totalorder %s18, 1
    %p141 = por %p139, %p140
    %p142 = scmp.ne.s32.totalorder %s133, %s134
    %p143 = scmp.eq.s32.totalorder %s18, 0
    %p144 = por %p142, %p143
    %p145 = scmp.ne.s32.totalorder %s133, %s134
    %p146 = scmp.eq.s32.totalorder %s19, 1
    %p147 = por %p145, %p146
    %p149 = scmp.ne.s32.totalorder %s134, %s148
    %p150 = scmp.eq.s32.totalorder %s19, 0
    %p151 = por %p149, %p150
    %s153 = sadd.s32 %s152, 1
    %p156 = scmp.eq.s32.totalorder %s13, 1
    %p157 = scmp.ne.s32.totalorder %s152, %s154
    %p158 = scmp.eq.s32.totalorder %s13, 0
    %p159 = por %p157, %p158
    %p160 = scmp.ne.s32.totalorder %s152, %s154
    %p161 = scmp.eq.s32.totalorder %s18, 1
    %p162 = por %p160, %p161
    %p163 = scmp.ne.s32.totalorder %s154, %s155
    %p164 = scmp.eq.s32.totalorder %s18, 0
    %p165 = por %p163, %p164
    %p166 = scmp.ne.s32.totalorder %s154, %s155
    %p167 = scmp.eq.s32.totalorder %s19, 1
    %p168 = por %p166, %p167
    %p170 = scmp.ne.s32.totalorder %s155, %s169
    %p171 = scmp.eq.s32.totalorder %s19, 0
    %p172 = por %p170, %p171
    %s173 = ssub.s32 %s13, %s20
    %p174 = scmp.eq.s32.totalorder %s173, 0
    %s176 = sadd.s32 %s175, 1
    %s177 = scalar_select %p174, %s175, %s176
    %p180 = pneg %p174
    %p181 = scmp.eq.s32.totalorder %s13, 1
    %p182 = por %p180, %p181
    %p183 = scmp.ne.s32.totalorder %s175, %s178
    %p184 = scmp.eq.s32.totalorder %s13, 0
    %p185 = por %p183, %p184
    %p186 = scmp.ne.s32.totalorder %s175, %s178
    %p187 = scmp.eq.s32.totalorder %s18, 1
    %p188 = por %p186, %p187
    %p189 = scmp.ne.s32.totalorder %s178, %s179
    %p190 = scmp.eq.s32.totalorder %s18, 0
    %p191 = por %p189, %p190
    %p192 = scmp.ne.s32.totalorder %s178, %s179
    %p193 = scmp.eq.s32.totalorder %s19, 1
    %p194 = por %p192, %p193
    %p196 = scmp.ne.s32.totalorder %s179, %s195
    %p197 = scmp.eq.s32.totalorder %s19, 0
    %p198 = por %p196, %p197
    %p199 = scmp.le.s32.totalorder 1, %s13
    %p200 = scmp.lt.s32.totalorder %s13, 3
    %p201 = pnand %p199, %p200
    %p202 = pneg %p201
    // Predicated region
    $region9: #{tpu_custom_call.1} parent=5 // pred_check
      _
    $region10: #{tpu_custom_call.1} parent=5 // pred_check_branch
      %204 = sbr.rel (%p201) target = $region12
    $region11: #{tpu_custom_call.1} parent=5 // pred_region
      %s205 = ssub.s32 %s13, 1
      // Predicated region
      $region13: #{tpu_custom_call.1} parent=11 // pred_check
        %p206 = pneg %p60
      $region14: #{tpu_custom_call.1} parent=11 // pred_check_branch
        %208 = sbr.rel (%p206) target = $region16
      $region15: #{tpu_custom_call.1} parent=11 // pred_region
        _
      $region16: #{tpu_custom_call.1} parent=11 // pred_fallthru
        _
      // Predicated region
      $region17: #{tpu_custom_call.1} parent=11 // pred_check
        %p209 = pneg %p81
      $region18: #{tpu_custom_call.1} parent=11 // pred_check_branch
        %211 = sbr.rel (%p209) target = $region20
      $region19: #{tpu_custom_call.1} parent=11 // pred_region
        _
      $region20: #{tpu_custom_call.1} parent=11 // pred_fallthru
        _
      // Predicated region
      $region21: #{tpu_custom_call.1} parent=11 // pred_check
        %p212 = pneg %p102
      $region22: #{tpu_custom_call.1} parent=11 // pred_check_branch
        %214 = sbr.rel (%p212) target = $region24
      $region23: #{tpu_custom_call.1} parent=11 // pred_region
        _
      $region24: #{tpu_custom_call.1} parent=11 // pred_fallthru
        _
      // Predicated region
      $region25: #{tpu_custom_call.1} parent=11 // pred_check
        %p215 = pneg %p123
      $region26: #{tpu_custom_call.1} parent=11 // pred_check_branch
        %217 = sbr.rel (%p215) target = $region28
      $region27: #{tpu_custom_call.1} parent=11 // pred_region
        _
      $region28: #{tpu_custom_call.1} parent=11 // pred_fallthru
        _
      // Predicated region
      $region29: #{tpu_custom_call.1} parent=11 // pred_check
        %p218 = pneg %p144
      $region30: #{tpu_custom_call.1} parent=11 // pred_check_branch
        %220 = sbr.rel (%p218) target = $region32
      $region31: #{tpu_custom_call.1} parent=11 // pred_region
        _
      $region32: #{tpu_custom_call.1} parent=11 // pred_fallthru
        _
      // Predicated region
      $region33: #{tpu_custom_call.1} parent=11 // pred_check
        %p221 = pneg %p165
      $region34: #{tpu_custom_call.1} parent=11 // pred_check_branch
        %223 = sbr.rel (%p221) target = $region36
      $region35: #{tpu_custom_call.1} parent=11 // pred_region
        _
      $region36: #{tpu_custom_call.1} parent=11 // pred_fallthru
        _
    $region12: #{tpu_custom_call.1} parent=5 // pred_fallthru
      _
    %p224 = scmp.lt.s32.totalorder %s13, 2
    // Predicated region
    $region37: #{tpu_custom_call.1} parent=5 // pred_check
      %p225 = pneg %p224
    $region38: #{tpu_custom_call.1} parent=5 // pred_check_branch
      %227 = sbr.rel (%p225) target = $region40
    $region39: #{tpu_custom_call.1} parent=5 // pred_region
      // Predicated region
      $region41: #{tpu_custom_call.1} parent=39 // pred_check
        %p228 = pneg %p33
      $region42: #{tpu_custom_call.1} parent=39 // pred_check_branch
        %230 = sbr.rel (%p228) target = $region44
      $region43: #{tpu_custom_call.1} parent=39 // pred_region
        %s231 = smul.u32 2, %s13
        %p232 = scmp.lt.s32.totalorder %s231, 3
        %s233 = scalar_select %p232, %s231, 3
        %s234 = smul.addr %s233, 8
        %s235 = scalar_lea.vmem %s0, %s234
        %s236 = smul.u32 2, %s13
      $region44: #{tpu_custom_call.1} parent=39 // pred_fallthru
        _
    $region40: #{tpu_custom_call.1} parent=5 // pred_fallthru
      _
    %p237 = scmp.le.s32.totalorder 1, %s13
    %p238 = scmp.lt.s32.totalorder %s13, 3
    %p239 = pnand %p237, %p238
    %p240 = pneg %p239
    // Predicated region
    $region45: #{tpu_custom_call.1} parent=5 // pred_check
      _
    $region46: #{tpu_custom_call.1} parent=5 // pred_check_branch
      %242 = sbr.rel (%p239) target = $region48
    $region47: #{tpu_custom_call.1} parent=5 // pred_region
      %s243 = ssub.s32 %s13, 1
      %s244 = smul.u32 2, %s18
      %p245 = scmp.lt.s32.totalorder %s244, 3
      %s246 = scalar_select %p245, %s244, 3
      %s247 = smul.addr %s246, 8
      %s248 = scalar_lea.vmem %s0, %s247
      %p249 = pneg %p39
      %p250 = pneg %p36
      %p251 = pneg %p60
      %p252 = pneg %p57
      %p253 = pneg %p81
      %p254 = pneg %p78
      %p255 = pneg %p102
      %p256 = pneg %p99
      %p257 = pneg %p123
      %p258 = pneg %p120
      %p259 = pneg %p144
      %p260 = pneg %p141
      %p261 = pneg %p165
      %p262 = pneg %p162
      %p263 = pneg %p191
      %p264 = pneg %p188
      %s265 = smul.u32 2, %s18
      %p266 = scmp.lt.s32.totalorder %s265, 3
      %s267 = scalar_select %p266, %s265, 3
      %s268 = smul.addr %s267, 8
      %s269 = scalar_lea.vmem %s7, %s268
      %s270 = smul.u32 2, %s18
      %p271 = scmp.lt.s32.totalorder %s270, 3
      %s272 = scalar_select %p271, %s270, 3
      %s273 = smul.addr %s272, 8
      %s274 = scalar_lea.vmem %s0, %s273
      %s275 = smul.u32 2, %s18
      %s276 = smul.u32 2, %s18
      %p277 = scmp.lt.s32.totalorder %s276, 3
      %s278 = scalar_select %p277, %s276, 3
      %s279 = smul.addr %s278, 8
      %s280 = scalar_lea.vmem %s7, %s279
      %s281 = smul.u32 2, %s18
      %v282 = vld [vmem:[%s1] sm:$0xff]
      %v283 = vld [vmem:[%s1 + $0x8] sm:$0xff]
      %v284 = vld [vmem:[%s1 + $0x10] sm:$0xff]
      %v285 = vld [vmem:[%s1 + $0x18] sm:$0xff]
      %v286 = vld [vmem:[%s3] sm:$0xff]
      %v287 = vld [vmem:[%s3 + $0x8] sm:$0xff]
      %v288 = vld [vmem:[%s3 + $0x10] sm:$0xff]
      %v289 = vld [vmem:[%s3 + $0x18] sm:$0xff]
      %v290 = vld [vmem:[%s5] sm:$0xff]
      %v291 = vld [vmem:[%s2] sm:$0xff]
      %v292 = vld [vmem:[%s2 + $0x8] sm:$0xff]
      %v293 = vld [vmem:[%s2 + $0x10] sm:$0xff]
      %v294 = vld [vmem:[%s2 + $0x18] sm:$0xff]
      %296 = vset.pattern.permute.xlu0 0
      %297 = vperm.xlu0 %296, %v291
      %v298 = vpop.permute.xlu0 %297
      %301 = vset.pattern.permute.xlu0 0
      %302 = vperm.xlu0 %301, %v292
      %v303 = vpop.permute.xlu0 %302
      %306 = vset.pattern.permute.xlu0 0
      %307 = vperm.xlu0 %306, %v293
      %v308 = vpop.permute.xlu0 %307
      %311 = vset.pattern.permute.xlu0 0
      %312 = vperm.xlu0 %311, %v294
      %v313 = vpop.permute.xlu0 %312
      %v315 = vld [vmem:[%s4] sm:$0xff]
      %v316 = vld [vmem:[%s4 + $0x8] sm:$0xff]
      %v317 = vld [vmem:[%s4 + $0x10] sm:$0xff]
      %v318 = vld [vmem:[%s4 + $0x18] sm:$0xff]
      %320 = vset.pattern.permute.xlu0 0
      %321 = vperm.xlu0 %320, %v315
      %v322 = vpop.permute.xlu0 %321
      %325 = vset.pattern.permute.xlu0 0
      %326 = vperm.xlu0 %325, %v316
      %v327 = vpop.permute.xlu0 %326
      %330 = vset.pattern.permute.xlu0 0
      %331 = vperm.xlu0 %330, %v317
      %v332 = vpop.permute.xlu0 %331
      %335 = vset.pattern.permute.xlu0 0
      %336 = vperm.xlu0 %335, %v318
      %v337 = vpop.permute.xlu0 %336
      %v339 = vld [vmem:[%s6] sm:$0x1]
      %v341 = vperm.slane %v339, 0
      %v343 = vld [vmem:[%s274] sm:$0xff]
      %v344 = vld [vmem:[%s274 + $0x8] sm:$0xff]
      %vm345 = vcmask 31744
      %v347 = vsel %vm345, %v282, 0
      %v350 = vsel %vm345, %v283, 0
      %v353 = vsel %vm345, %v284, 0
      %v356 = vsel %vm345, %v285, 0
      %v359 = vsel %vm345, %v343, 0
      %v362 = vsel %vm345, %v344, 0
      %364 = vmatpush.xpose.msra.mxu0 0.0
      %365 = vmatpush.xpose.msra.mxu0 0.0
      %366 = vmatpush.xpose.msra.mxu0 0.0
      %367 = vmatpush.xpose.msra.mxu0 0.0
      %368 = vmatpush.xpose.msra.mxu0 0.0
      %369 = vmatpush.xpose.msra.mxu0 0.0
      %370 = vmatpush.xpose.msra.mxu0 0.0
      %371 = vmatpush.xpose.msra.mxu0 0.0
      %372 = vmatpush.xpose.msra.mxu0 0.0
      %373 = vmatpush.xpose.msra.mxu0 0.0
      %374 = vmatpush.xpose.msra.mxu0 0.0
      %375 = vmatpush.xpose.msra.mxu0 0.0
      %376 = vmatpush.xpose.msra.mxu0 0.0
      %377 = vmatpush.xpose.msra.mxu0 0.0
      %378 = vmatpush.xpose.msra.mxu0 %v362
      %379 = vmatpush.xpose.msra.mxu0 %v359
      %380 = vmatmul.f32.gmra.mxu0 %v347
      %v381 = vpop.f32.mrf.mxu0
      %v382 = vadd.f32 %v298, %v381
      %383 = vmatmul.f32.gmra.mxu0 %v350
      %v384 = vpop.f32.mrf.mxu0
      %v385 = vadd.f32 %v303, %v384
      %386 = vmatmul.f32.gmra.mxu0 %v353
      %v387 = vpop.f32.mrf.mxu0
      %v388 = vadd.f32 %v308, %v387
      %389 = vmatmul.f32.gmra.mxu0 %v356
      %v390 = vpop.f32.mrf.mxu0
      %v391 = vadd.f32 %v313, %v390
      %392 = vdwg.mxu0
      %v393 = vtanh.pop %v382
      %v394 = vtanh.pop %v385
      %v395 = vtanh.pop %v388
      %v396 = vtanh.pop %v391
      %vm397 = vcmask 261120
      %v399 = vsel %vm397, %v286, 0
      %v402 = vsel %vm397, %v287, 0
      %v405 = vsel %vm397, %v288, 0
      %v408 = vsel %vm397, %v289, 0
      %410 = vmatpush.msra.mxu0 0.0
      %411 = vmatpush.msra.mxu0 0.0
      %412 = vmatpush.msra.mxu0 0.0
      %413 = vmatpush.msra.mxu0 0.0
      %414 = vmatpush.msra.mxu0 0.0
      %415 = vmatpush.msra.mxu0 0.0
      %416 = vmatpush.msra.mxu0 0.0
      %417 = vmatpush.msra.mxu0 0.0
      %418 = vmatpush.msra.mxu0 0.0
      %419 = vmatpush.msra.mxu0 0.0
      %420 = vmatpush.msra.mxu0 0.0
      %421 = vmatpush.msra.mxu0 0.0
      %422 = vmatpush.msra.mxu0 %v396
      %423 = vmatpush.msra.mxu0 %v395
      %424 = vmatpush.msra.mxu0 %v394
      %425 = vmatpush.msra.mxu0 %v393
      %426 = vmatmul.f32.gmra.mxu0 %v399
      %v427 = vpop.f32.mrf.mxu0
      %v428 = vadd.f32 %v322, %v427
      %429 = vmatmul.f32.gmra.mxu0 %v402
      %v430 = vpop.f32.mrf.mxu0
      %v431 = vadd.f32 %v327, %v430
      %432 = vmatmul.f32.gmra.mxu0 %v405
      %v433 = vpop.f32.mrf.mxu0
      %v434 = vadd.f32 %v332, %v433
      %435 = vmatmul.f32.gmra.mxu0 %v408
      %v436 = vpop.f32.mrf.mxu0
      %v437 = vadd.f32 %v337, %v436
      %438 = vdwg.mxu0
      %v439 = vtanh.pop %v428
      %v440 = vtanh.pop %v431
      %v441 = vtanh.pop %v434
      %v442 = vtanh.pop %v437
      %443 = vxpose.xlu0.b32.start [1/16] %v439, 128
      %444 = vxpose.xlu0.b32.cont [2/16] %v440, 128
      %445 = vxpose.xlu0.b32.cont [3/16] %v441, 128
      %446 = vxpose.xlu0.b32.cont [4/16] %v442, 128
      %447 = vxpose.xlu0.b32.cont [5/16] 0.0, 128
      %448 = vxpose.xlu0.b32.cont [6/16] 0.0, 128
      %449 = vxpose.xlu0.b32.cont [7/16] 0.0, 128
      %450 = vxpose.xlu0.b32.cont [8/16] 0.0, 128
      %451 = vxpose.xlu0.b32.cont [9/16] 0.0, 128
      %452 = vxpose.xlu0.b32.cont [10/16] 0.0, 128
      %453 = vxpose.xlu0.b32.cont [11/16] 0.0, 128
      %454 = vxpose.xlu0.b32.cont [12/16] 0.0, 128
      %455 = vxpose.xlu0.b32.cont [13/16] 0.0, 128
      %456 = vxpose.xlu0.b32.cont [14/16] 0.0, 128
      %457 = vxpose.xlu0.b32.cont [15/16] 0.0, 128
      %458 = vxpose.xlu0.b32.end [16/16] 0.0, 128
      %v459 = vpop.trf.xlu0
      %v460 = vpop.trf.xlu0
      %v461 = vpop.trf.xlu0
      %v462 = vpop.trf.xlu0
      %v463 = vpop.trf.xlu0
      %v464 = vpop.trf.xlu0
      %v465 = vpop.trf.xlu0
      %v466 = vpop.trf.xlu0
      %v467 = vpop.trf.xlu0
      %v468 = vpop.trf.xlu0
      %v469 = vpop.trf.xlu0
      %v470 = vpop.trf.xlu0
      %v471 = vpop.trf.xlu0
      %v472 = vpop.trf.xlu0
      %v473 = vpop.trf.xlu0
      %v474 = vpop.trf.xlu0
      %v476 = vsel %vm397, %v459, 0
      %v479 = vsel %vm397, %v460, 0
      %v482 = vsel %vm397, %v290, 0
      %484 = vmatpush.xpose.msra.mxu0 0.0
      %485 = vmatpush.xpose.msra.mxu0 0.0
      %486 = vmatpush.xpose.msra.mxu0 0.0
      %487 = vmatpush.xpose.msra.mxu0 0.0
      %488 = vmatpush.xpose.msra.mxu0 0.0
      %489 = vmatpush.xpose.msra.mxu0 0.0
      %490 = vmatpush.xpose.msra.mxu0 0.0
      %491 = vmatpush.xpose.msra.mxu0 0.0
      %492 = vmatpush.xpose.msra.mxu0 0.0
      %493 = vmatpush.xpose.msra.mxu0 0.0
      %494 = vmatpush.xpose.msra.mxu0 0.0
      %495 = vmatpush.xpose.msra.mxu0 0.0
      %496 = vmatpush.xpose.msra.mxu0 0.0
      %497 = vmatpush.xpose.msra.mxu0 0.0
      %498 = vmatpush.xpose.msra.mxu0 0.0
      %499 = vmatpush.xpose.msra.mxu0 %v482
      %500 = vmatmul.f32.gmra.mxu0 %v476
      %v501 = vpop.f32.mrf.mxu0
      %v502 = vadd.f32 %v341, %v501
      %503 = vmatmul.f32.gmra.mxu0 %v479
      %v504 = vpop.f32.mrf.mxu0
      %v505 = vadd.f32 %v341, %v504
      %506 = vdwg.mxu0
      %vm507 = vcmask 64512
      %508 = vst.msk [vmem:[%s280] sm:$0xff] %vm507, %v502
      %509 = vst.msk [vmem:[%s280 + $0x8] sm:$0xff] %vm507, %v505
      %s510 = smul.u32 2, %s18
      %p511 = scmp.lt.s32.totalorder %s510, 3
      %s512 = scalar_select %p511, %s510, 3
      %s513 = smul.addr %s512, 8
      %s514 = scalar_lea.vmem %s7, %s513
      // Predicated region
      $region49: #{tpu_custom_call.1} parent=47 // pred_check
        %p515 = pneg %p188
      $region50: #{tpu_custom_call.1} parent=47 // pred_check_branch
        %517 = sbr.rel (%p515) target = $region52
      $region51: #{tpu_custom_call.1} parent=47 // pred_region
        %s518 = smul.u32 2, %s18
      $region52: #{tpu_custom_call.1} parent=47 // pred_fallthru
        _
    $region48: #{tpu_custom_call.1} parent=5 // pred_fallthru
      _
    %p519 = scmp.le.s32.totalorder 2, %s13
    // Predicated region
    $region53: #{tpu_custom_call.1} parent=5 // pred_check
      %p520 = pneg %p519
    $region54: #{tpu_custom_call.1} parent=5 // pred_check_branch
      %522 = sbr.rel (%p520) target = $region56
    $region55: #{tpu_custom_call.1} parent=5 // pred_region
      %s523 = ssub.s32 %s13, 2
      // Predicated region
      $region57: #{tpu_custom_call.1} parent=55 // pred_check
        %p524 = pneg %p194
      $region58: #{tpu_custom_call.1} parent=55 // pred_check_branch
        %526 = sbr.rel (%p524) target = $region60
      $region59: #{tpu_custom_call.1} parent=55 // pred_region
        %s527 = smul.u32 2, %s19
        %p528 = scmp.lt.s32.totalorder %s527, 3
        %s529 = scalar_select %p528, %s527, 3
        %s530 = smul.addr %s529, 8
        %s531 = scalar_lea.vmem %s7, %s530
      $region60: #{tpu_custom_call.1} parent=55 // pred_fallthru
        _
    $region56: #{tpu_custom_call.1} parent=5 // pred_fallthru
      _
  $region6: #{tpu_custom_call.1} parent=0 // loop_footer
    %s17 = sadd.s32 1, %s13
  $region7: #{tpu_custom_call.1} parent=0 // loop_footer_branch
    %12 = sbr.rel target = $region3
  $region8: #{tpu_custom_call.1} parent=0 // loop_exit
    _

</llo_original>
